<compile_context>
chip_gen: v7x
topology: tpu7x:2x2x1
jax: 0.10.0
libtpu: 0.0.40
codegen_flags: <defaults>
</compile_context>

<pallas_src>
import functools

import jax
import jax.numpy as jnp
from jax.experimental import pallas as pl
from jax.experimental.pallas import tpu as pltpu


def _round_up(x, m):
    return (x + m - 1) // m * m


def _ltc_kernel(comb_ref, t_ref, w1_ref, whd_ref, b1_ref, bhd_ref, out_ref, *, hp):
    """One batch tile of the LTC cell.

    comb = [x | h] zero-padded to [TB, KP] (bf16).
    w1   = backbone[0] weight, [KP, HP]   (bf16).
    whd  = backbone[2] folded into (time|g|h) heads, [HP, 3*HP] (bf16).
    b1   = backbone[0] bias, [1, HP]      (f32).
    bhd  = folded head biases, [1, 3*HP]  (f32).
    """
    # backbone Linear -> tanh (f32 accumulation, f32 activation math).
    z = (jnp.dot(comb_ref[...], w1_ref[...],
                 preferred_element_type=jnp.float32)
         + b1_ref[...])
    feat = jnp.tanh(z).astype(jnp.bfloat16)

    # fused (backbone[2] ∘ heads) GEMM, then static lane-aligned slices.
    heads = (jnp.dot(feat, whd_ref[...],
                     preferred_element_type=jnp.float32)
             + bhd_ref[...])
    f_t = jax.nn.sigmoid(heads[:, 0 * hp:1 * hp])
    g_x = heads[:, 1 * hp:2 * hp]
    h_x = heads[:, 2 * hp:3 * hp]

    # closed-form gating; t broadcasts [TB,1] -> [TB,HP]; all f32.
    gate = jax.nn.sigmoid(-f_t * t_ref[...])
    out_ref[...] = h_x + gate * (g_x - h_x)


def prepare_kernel_params(params, input_size, hidden_size):
    """One-time conversion of torch-layout params into kernel-ready operands
    (pre-transposed, zero-padded to lane-dense shapes, backbone[2] folded into
    the head weights, weights cast to bf16).  Call once, reuse per timestep."""
    I, H = input_size, hidden_size
    HP = _round_up(H, 128)                 # lane-dense hidden width
    KP = _round_up(I + H, 128)             # lane-dense backbone contraction width
    f32 = jnp.float32

    # backbone[0]: torch weight [H, I+H] -> transposed/padded to [KP, HP].
    w1_t = jnp.transpose(params["backbone0_w"]).astype(f32)      # [I+H, H]
    w1 = jnp.zeros((KP, HP), f32)
    w1 = w1.at[:I + H, :H].set(w1_t)
    b1 = jnp.zeros((1, HP), f32).at[0, :H].set(params["backbone0_b"])

    # Fold backbone[2] (W2, b2) into the three heads (exact weight folding):
    #   heads = (tanh(z) @ W2^T + b2) @ Wh^T + bh
    #         = tanh(z) @ (W2^T @ Wh^T) + (b2 @ Wh^T + bh)
    w2_t = jnp.transpose(params["backbone2_w"]).astype(f32)      # [H, H]
    b2 = params["backbone2_b"].astype(f32)                        # [H]

    whd = jnp.zeros((HP, 3 * HP), f32)
    bhd = jnp.zeros((1, 3 * HP), f32)
    for idx, name in enumerate(("time", "g", "h")):
        wh_t = jnp.transpose(params[f"{name}_w"]).astype(f32)     # [H, H]
        whd = whd.at[:H, idx * HP:idx * HP + H].set(w2_t @ wh_t)
        bhd = bhd.at[0, idx * HP:idx * HP + H].set(b2 @ wh_t + params[f"{name}_b"])

    return {
        "w1": w1.astype(jnp.bfloat16),       # [KP, HP]
        "whd": whd.astype(jnp.bfloat16),     # [HP, 3HP]
        "b1": b1,                            # [1, HP]   f32
        "bhd": bhd,                          # [1, 3HP]  f32
    }


def ltc_forward(x, h, t, kparams, *, block_b=128):
    """x: [B, I], h: [B, H], t: [B]. Returns (h_new, h_new) like the module."""
    B, I = x.shape
    H = h.shape[-1]
    KP, HP = kparams["w1"].shape

    # batch tile: multiple of 8 sublanes, capped at block_b.
    TB = _round_up(min(block_b, _round_up(B, 8)), 8)
    BP = _round_up(B, TB)

    # combined [x | h], zero-padded to [BP, KP], bf16 for the MXU.
    comb = jnp.zeros((BP, KP), jnp.float32)
    comb = comb.at[:B, :I].set(x.astype(jnp.float32))
    comb = comb.at[:B, I:I + H].set(h.astype(jnp.float32))
    comb = comb.astype(jnp.bfloat16)

    t2 = jnp.zeros((BP, 1), jnp.float32).at[:B, 0].set(t.astype(jnp.float32))

    grid = (BP // TB,)
    act_spec = pl.BlockSpec((TB, KP), lambda i: (i, 0))
    t_spec = pl.BlockSpec((TB, 1), lambda i: (i, 0))

    def const_spec(shape):
        # weights/biases: constant index_map -> stay VMEM-resident across grid.
        return pl.BlockSpec(shape, lambda i: (0, 0))

    out = pl.pallas_call(
        functools.partial(_ltc_kernel, hp=HP),
        out_shape=jax.ShapeDtypeStruct((BP, HP), jnp.float32),
        grid=grid,
        in_specs=[
            act_spec,                       # combined [x | h]
            t_spec,                         # t
            const_spec((KP, HP)),           # w1
            const_spec((HP, 3 * HP)),       # folded head weights
            const_spec((1, HP)),            # backbone[0] bias
            const_spec((1, 3 * HP)),        # folded head biases
        ],
        out_specs=pl.BlockSpec((TB, HP), lambda i: (i, 0)),
        compiler_params=pltpu.CompilerParams(
            dimension_semantics=("parallel",)),
    )(comb, t2, kparams["w1"], kparams["whd"], kparams["b1"], kparams["bhd"])

    h_new = out[:B, :H]
    return h_new, h_new


def ltc_reference(x, h, t, params):
    """Pure-JAX f32 reference matching the PyTorch module exactly."""
    combined = jnp.concatenate([x, h], axis=-1)
    z = combined @ params["backbone0_w"].T + params["backbone0_b"]
    feat = jnp.tanh(z) @ params["backbone2_w"].T + params["backbone2_b"]
    f_t = jax.nn.sigmoid(feat @ params["time_w"].T + params["time_b"])
    g_x = feat @ params["g_w"].T + params["g_b"]
    h_x = feat @ params["h_w"].T + params["h_b"]
    gate = jax.nn.sigmoid(-f_t * t.reshape(-1, 1))
    h_new = gate * g_x + (1 - gate) * h_x
    return h_new, h_new


def init_params(key, input_size, hidden_size):
    """Deterministic synthetic init (torch-Linear-like uniform bounds)."""
    H, I = hidden_size, input_size
    ks = jax.random.split(key, 12)

    def lin(kw, kb, fan_in, fan_out):
        bound = 1.0 / jnp.sqrt(fan_in)
        w = jax.random.uniform(kw, (fan_out, fan_in), jnp.float32, -bound, bound)
        b = jax.random.uniform(kb, (fan_out,), jnp.float32, -bound, bound)
        return w, b

    p = {}
    p["backbone0_w"], p["backbone0_b"] = lin(ks[0], ks[1], I + H, H)
    p["backbone2_w"], p["backbone2_b"] = lin(ks[2], ks[3], H, H)
    p["time_w"], p["time_b"] = lin(ks[4], ks[5], H, H)
    p["g_w"], p["g_b"] = lin(ks[6], ks[7], H, H)
    p["h_w"], p["h_b"] = lin(ks[8], ks[9], H, H)
    # tau / A are parameters of the module but unused in forward().
    p["tau"] = jnp.ones((H,), jnp.float32)
    p["A"] = jax.random.normal(ks[10], (H,), jnp.float32)
    return p


if __name__ == "__main__":
    key = jax.random.PRNGKey(0)
    B, I, H = 8, 16, 32
    kx, kh, kt, kp = jax.random.split(key, 4)
    x = jax.random.normal(kx, (B, I), jnp.float32)
    h = jax.random.normal(kh, (B, H), jnp.float32)
    t = jax.random.uniform(kt, (B,), jnp.float32)
    params = init_params(kp, I, H)

    # one-time weight prep (transpose / pad / fold / bf16 cast), reused per step
    kparams = prepare_kernel_params(params, I, H)

    h_new, _ = ltc_forward(x, h, t, kparams)
    h_new = jax.block_until_ready(h_new)
    h_ref, _ = ltc_reference(x, h, t, params)

    assert h_new.shape == (B, H)
    # bf16 matmul inputs (f32 accumulation) -> loosened tolerance vs f32 ref.
    assert jnp.allclose(h_new, h_ref, atol=5e-2, rtol=5e-2), "mismatch vs reference"
    print("KERNEL_OK")
</pallas_src>

<mosaic_0001>
module attributes {stable_mosaic.version = 11 : i64} {
  func.func @_ltc_kernel(%arg0: i32, %arg1: memref<8x128xbf16, #tpu.memory_space<vmem>>, %arg2: memref<8x1xf32, #tpu.memory_space<vmem>>, %arg3: memref<128x128xbf16, #tpu.memory_space<vmem>>, %arg4: memref<128x384xbf16, #tpu.memory_space<vmem>>, %arg5: memref<1x128xf32, #tpu.memory_space<vmem>>, %arg6: memref<1x384xf32, #tpu.memory_space<vmem>>, %arg7: memref<8x128xf32, #tpu.memory_space<vmem>>) attributes {dimension_semantics = [#tpu.dimension_semantics<parallel>], iteration_bounds = array<i64: 1>, scalar_prefetch = 0 : i64, scratch_operands = 0 : i64, tpu.core_type = #tpu.core_type<tc>, window_params = [{transform_indices = @transform_0, window_bounds = array<i64: 8, 128>}, {transform_indices = @transform_1, window_bounds = array<i64: 8, 1>}, {pipeline_mode = #tpu.pipeline_mode<synchronous>, transform_indices = @transform_2, window_bounds = array<i64: 128, 128>}, {pipeline_mode = #tpu.pipeline_mode<synchronous>, transform_indices = @transform_3, window_bounds = array<i64: 128, 384>}, {pipeline_mode = #tpu.pipeline_mode<synchronous>, transform_indices = @transform_4, window_bounds = array<i64: 1, 128>}, {pipeline_mode = #tpu.pipeline_mode<synchronous>, transform_indices = @transform_5, window_bounds = array<i64: 1, 384>}, {transform_indices = @transform_6, window_bounds = array<i64: 8, 128>}]} {
    %c0 = arith.constant 0 : index
    %c0_0 = arith.constant 0 : index
    %0 = vector.load %arg1[%c0, %c0_0] : memref<8x128xbf16, #tpu.memory_space<vmem>>, vector<8x128xbf16>
    %c0_1 = arith.constant 0 : index
    %c0_2 = arith.constant 0 : index
    %1 = vector.load %arg3[%c0_1, %c0_2] : memref<128x128xbf16, #tpu.memory_space<vmem>>, vector<128x128xbf16>
    %cst = arith.constant dense<0.000000e+00> : vector<8x128xf32>
    %2 = tpu.matmul %0, %1, %cst {dimension_numbers = #tpu.dot_dimension_numbers<[1], [0], [0], [1], [0, 0, 1, 1], [], []>} : vector<8x128xbf16>, vector<128x128xbf16>, vector<8x128xf32> -> vector<8x128xf32>
    %c0_3 = arith.constant 0 : index
    %c0_4 = arith.constant 0 : index
    %3 = vector.load %arg5[%c0_3, %c0_4] : memref<1x128xf32, #tpu.memory_space<vmem>>, vector<1x128xf32>
    %4 = vector.broadcast %3 : vector<1x128xf32> to vector<8x128xf32>
    %5 = arith.addf %2, %4 : vector<8x128xf32>
    %6 = math.tanh %5 : vector<8x128xf32>
    %7 = arith.truncf %6 : vector<8x128xf32> to vector<8x128xbf16>
    %c0_5 = arith.constant 0 : index
    %c0_6 = arith.constant 0 : index
    %8 = vector.load %arg4[%c0_5, %c0_6] : memref<128x384xbf16, #tpu.memory_space<vmem>>, vector<128x384xbf16>
    %cst_7 = arith.constant dense<0.000000e+00> : vector<8x384xf32>
    %9 = tpu.matmul %7, %8, %cst_7 {dimension_numbers = #tpu.dot_dimension_numbers<[1], [0], [0], [1], [0, 0, 1, 1], [], []>} : vector<8x128xbf16>, vector<128x384xbf16>, vector<8x384xf32> -> vector<8x384xf32>
    %c0_8 = arith.constant 0 : index
    %c0_9 = arith.constant 0 : index
    %10 = vector.load %arg6[%c0_8, %c0_9] : memref<1x384xf32, #tpu.memory_space<vmem>>, vector<1x384xf32>
    %11 = vector.broadcast %10 : vector<1x384xf32> to vector<8x384xf32>
    %12 = arith.addf %9, %11 : vector<8x384xf32>
    %13 = vector.extract_strided_slice %12 {offsets = [0, 0], sizes = [8, 128], strides = [1, 1]} : vector<8x384xf32> to vector<8x128xf32>
    %14 = arith.negf %13 : vector<8x128xf32>
    %15 = math.exp %14 : vector<8x128xf32>
    %cst_10 = arith.constant 1.000000e+00 : f32
    %16 = vector.broadcast %cst_10 : f32 to vector<8x128xf32>
    %17 = arith.addf %16, %15 : vector<8x128xf32>
    %18 = arith.divf %16, %17 : vector<8x128xf32>
    %19 = vector.extract_strided_slice %12 {offsets = [0, 128], sizes = [8, 128], strides = [1, 1]} : vector<8x384xf32> to vector<8x128xf32>
    %20 = vector.extract_strided_slice %12 {offsets = [0, 256], sizes = [8, 128], strides = [1, 1]} : vector<8x384xf32> to vector<8x128xf32>
    %cst_11 = arith.constant 0.000000e+00 : f32
    %21 = vector.broadcast %cst_11 : f32 to vector<8x128xf32>
    %22 = arith.subf %21, %18 : vector<8x128xf32>
    %c0_12 = arith.constant 0 : index
    %c0_13 = arith.constant 0 : index
    %23 = vector.load %arg2[%c0_12, %c0_13] : memref<8x1xf32, #tpu.memory_space<vmem>>, vector<8x1xf32>
    %24 = vector.broadcast %23 : vector<8x1xf32> to vector<8x128xf32>
    %25 = arith.mulf %22, %24 : vector<8x128xf32>
    %26 = arith.negf %25 : vector<8x128xf32>
    %27 = math.exp %26 : vector<8x128xf32>
    %cst_14 = arith.constant 1.000000e+00 : f32
    %28 = vector.broadcast %cst_14 : f32 to vector<8x128xf32>
    %29 = arith.addf %28, %27 : vector<8x128xf32>
    %30 = arith.divf %28, %29 : vector<8x128xf32>
    %31 = arith.subf %19, %20 : vector<8x128xf32>
    %32 = arith.mulf %30, %31 : vector<8x128xf32>
    %33 = arith.addf %20, %32 : vector<8x128xf32>
    %c0_15 = arith.constant 0 : index
    %c0_16 = arith.constant 0 : index
    %34 = vector.load %arg7[%c0_15, %c0_16] : memref<8x128xf32, #tpu.memory_space<vmem>>, vector<8x128xf32>
    tpu.vector_store %arg7[%c0_15, %c0_16], %33 {strides = array<i32>} : memref<8x128xf32, #tpu.memory_space<vmem>>, vector<8x128xf32>,
    return
  }
  func.func @transform_0(%arg0: i32) -> (i32, i32) {
    %c0_i32 = arith.constant 0 : i32
    %c0_i32_0 = arith.constant 0 : i32
    return %arg0, %c0_i32 : i32, i32
  }
  func.func @transform_1(%arg0: i32) -> (i32, i32) {
    %c0_i32 = arith.constant 0 : i32
    %c0_i32_0 = arith.constant 0 : i32
    return %arg0, %c0_i32 : i32, i32
  }
  func.func @transform_2(%arg0: i32) -> (i32, i32) {
    %c0_i32 = arith.constant 0 : i32
    %c0_i32_0 = arith.constant 0 : i32
    %c0_i32_1 = arith.constant 0 : i32
    return %c0_i32, %c0_i32_0 : i32, i32
  }
  func.func @transform_3(%arg0: i32) -> (i32, i32) {
    %c0_i32 = arith.constant 0 : i32
    %c0_i32_0 = arith.constant 0 : i32
    %c0_i32_1 = arith.constant 0 : i32
    return %c0_i32, %c0_i32_0 : i32, i32
  }
  func.func @transform_4(%arg0: i32) -> (i32, i32) {
    %c0_i32 = arith.constant 0 : i32
    %c0_i32_0 = arith.constant 0 : i32
    %c0_i32_1 = arith.constant 0 : i32
    return %c0_i32, %c0_i32_0 : i32, i32
  }
  func.func @transform_5(%arg0: i32) -> (i32, i32) {
    %c0_i32 = arith.constant 0 : i32
    %c0_i32_0 = arith.constant 0 : i32
    %c0_i32_1 = arith.constant 0 : i32
    return %c0_i32, %c0_i32_0 : i32, i32
  }
  func.func @transform_6(%arg0: i32) -> (i32, i32) {
    %c0_i32 = arith.constant 0 : i32
    %c0_i32_0 = arith.constant 0 : i32
    return %arg0, %c0_i32 : i32, i32
  }
}

</mosaic_0001>

<llo_original>
// kernel: tpu_custom_call.1
$region0: #{tpu_custom_call.1}
  #allocation0 [shape = 'u32[]', space=smem, size = 0x4, offset = 0x4, fixed_abs, tag = 'smem constant byte address 0x4 - core index']
  #allocation1 [shape = 'u32[144,128]{1,0:T(1,128)}', space=vmem, size = 0x12000, scoped, tag = 'internal scratch']
  %s0 = inlined_call_operand.vmem [shape: bf16[8,128], index: 0, kind: input, shape index: {}]
  %s1 = inlined_call_operand.vmem [shape: f32[8,1], index: 1, kind: input, shape index: {}]
  %s2 = inlined_call_operand.hbm [shape: bf16[128,128], index: 2, kind: input, shape index: {}]
  %s3 = inlined_call_operand.hbm [shape: bf16[128,384], index: 3, kind: input, shape index: {}]
  %s4 = inlined_call_operand.vmem [shape: f32[1,128], index: 4, kind: input, shape index: {}]
  %s5 = inlined_call_operand.vmem [shape: f32[1,384], index: 5, kind: input, shape index: {}]
  %s6 = inlined_call_operand.hbm [shape: f32[8,128], index: 6, kind: output, shape index: {}]
  %s7 = sld [smem:[#allocation0]]
  $region42: #{tpu_custom_call.1} parent=0
    _
  %s9 = ssub.s32 1, %s7
  %s10 = scalar_select 0, %s9, %s7
  $region1: #{tpu_custom_call.1} parent=0
    #allocation2 [shape = 'u8[32768]{0}', space=vmem, size = 0x8000, scoped, tag = 'input window, operand 2, single buffered']
    #allocation3 [shape = 's32[1]{0}', space=sflag, size = 0x4, scoped, tag = 'scoped memory for tpu_custom_call.1']
    #allocation4 [shape = 's32[1]{0}', space=sflag, size = 0x4, scoped, tag = 'scoped memory for tpu_custom_call.1']
    #allocation5 [shape = 'u8[98304]{0}', space=vmem, size = 0x18000, scoped, tag = 'input window, operand 3, single buffered']
    #allocation6 [shape = 's32[1]{0}', space=sflag, size = 0x4, scoped, tag = 'scoped memory for tpu_custom_call.1']
    #allocation7 [shape = 'u8[4096]{0}', space=vmem, size = 0x1000, scoped, tag = 'output window, operand 0, single buffered']
    %11 = vsyncpa [#allocation3], 0
    %12 = vsyncpa [#allocation6], 0
    %13 = vsyncpa [#allocation4], 0
    // Predicated region
    $region2: #{tpu_custom_call.1} parent=1 // pred_check
      _
    $region3: #{tpu_custom_call.1} parent=1 // pred_check_branch
      %15 = sbr.rel (0) target = $region5
    $region4: #{tpu_custom_call.1} parent=1 // pred_region
      _
    $region5: #{tpu_custom_call.1} parent=1 // pred_fallthru
      _
    // Predicated region
    $region6: #{tpu_custom_call.1} parent=1 // pred_check
      _
    $region7: #{tpu_custom_call.1} parent=1 // pred_check_branch
      %17 = sbr.rel (0) target = $region9
    $region8: #{tpu_custom_call.1} parent=1 // pred_region
      _
    $region9: #{tpu_custom_call.1} parent=1 // pred_fallthru
      _
    // Predicated region
    $region10: #{tpu_custom_call.1} parent=1 // pred_check
      _
    $region11: #{tpu_custom_call.1} parent=1 // pred_check_branch
      %19 = sbr.rel (0) target = $region13
    $region12: #{tpu_custom_call.1} parent=1 // pred_region
      %s21 = ssub.s32 1024, 1024
      %22 = vsyncadd [#allocation3], %s21
      %s23 = sshll.u32 [#allocation2], 4
      %s24 = int_to_ptr.vmem [resolvable:$true] %s23
      %29 = dma.hbm_to_vmem [thread:$0]  %s2, 1024, %s24, [#allocation3], 64, 64, 4
    $region13: #{tpu_custom_call.1} parent=1 // pred_fallthru
      _
    // Predicated region
    $region14: #{tpu_custom_call.1} parent=1 // pred_check
      _
    $region15: #{tpu_custom_call.1} parent=1 // pred_check_branch
      %31 = sbr.rel (0) target = $region17
    $region16: #{tpu_custom_call.1} parent=1 // pred_region
      %s33 = ssub.s32 3072, 3072
      %34 = vsyncadd [#allocation6], %s33
      %s35 = sshll.u32 [#allocation5], 4
      %s36 = int_to_ptr.vmem [resolvable:$true] %s35
      %41 = dma.hbm_to_vmem [thread:$0]  %s3, 3072, %s36, [#allocation6], 192, 192, 12
    $region17: #{tpu_custom_call.1} parent=1 // pred_fallthru
      _
    // Predicated region
    $region18: #{tpu_custom_call.1} parent=1 // pred_check
      _
    $region19: #{tpu_custom_call.1} parent=1 // pred_check_branch
      %43 = sbr.rel (0) target = $region21
    $region20: #{tpu_custom_call.1} parent=1 // pred_region
      _
    $region21: #{tpu_custom_call.1} parent=1 // pred_fallthru
      _
    // Predicated region
    $region22: #{tpu_custom_call.1} parent=1 // pred_check
      _
    $region23: #{tpu_custom_call.1} parent=1 // pred_check_branch
      %45 = sbr.rel (0) target = $region25
    $region24: #{tpu_custom_call.1} parent=1 // pred_region
      _
    $region25: #{tpu_custom_call.1} parent=1 // pred_fallthru
      _
    // Predicated region
    $region26: #{tpu_custom_call.1} parent=1 // pred_check
      _
    $region27: #{tpu_custom_call.1} parent=1 // pred_check_branch
      %47 = sbr.rel (0) target = $region29
    $region28: #{tpu_custom_call.1} parent=1 // pred_region
      %48 = dma.done [#allocation3], 1024
    $region29: #{tpu_custom_call.1} parent=1 // pred_fallthru
      _
    // Predicated region
    $region30: #{tpu_custom_call.1} parent=1 // pred_check
      _
    $region31: #{tpu_custom_call.1} parent=1 // pred_check_branch
      %50 = sbr.rel (0) target = $region33
    $region32: #{tpu_custom_call.1} parent=1 // pred_region
      %51 = dma.done [#allocation6], 3072
    $region33: #{tpu_custom_call.1} parent=1 // pred_fallthru
      _
    %v53 = vld [vmem:[%s0] sm:$0xf]
    %v54 = vld [vmem:[#allocation2] sm:$0xf]
    %v55 = vld [vmem:[#allocation2 + $0x4] sm:$0xf]
    %v56 = vld [vmem:[#allocation2 + $0x8] sm:$0xf]
    %v57 = vld [vmem:[#allocation2 + $0xc] sm:$0xf]
    %v58 = vld [vmem:[#allocation2 + $0x10] sm:$0xf]
    %v59 = vld [vmem:[#allocation2 + $0x14] sm:$0xf]
    %v60 = vld [vmem:[#allocation2 + $0x18] sm:$0xf]
    %v61 = vld [vmem:[#allocation2 + $0x1c] sm:$0xf]
    %v62 = vld [vmem:[#allocation2 + $0x20] sm:$0xf]
    %v63 = vld [vmem:[#allocation2 + $0x24] sm:$0xf]
    %v64 = vld [vmem:[#allocation2 + $0x28] sm:$0xf]
    %v65 = vld [vmem:[#allocation2 + $0x2c] sm:$0xf]
    %v66 = vld [vmem:[#allocation2 + $0x30] sm:$0xf]
    %v67 = vld [vmem:[#allocation2 + $0x34] sm:$0xf]
    %v68 = vld [vmem:[#allocation2 + $0x38] sm:$0xf]
    %v69 = vld [vmem:[#allocation2 + $0x3c] sm:$0xf]
    %v70 = vld [vmem:[%s4] sm:$0x1]
    %v72 = vlaneseq
    %v73 = vshrl.u32 %v72, 7
    %v74 = vsub.s32 0, %v73
    %v75 = vrot.slane %v70, %v74
    %v93 = vunpack.c.l.b16 %v54
    %v94 = vunpack.c.l.b16 %v55
    %v95 = vunpack.c.l.b16 %v56
    %v96 = vunpack.c.l.b16 %v57
    %v97 = vunpack.c.l.b16 %v58
    %v98 = vunpack.c.l.b16 %v59
    %v99 = vunpack.c.l.b16 %v60
    %v100 = vunpack.c.l.b16 %v61
    %v101 = vunpack.c.l.b16 %v62
    %v102 = vunpack.c.l.b16 %v63
    %v103 = vunpack.c.l.b16 %v64
    %v104 = vunpack.c.l.b16 %v65
    %v105 = vunpack.c.l.b16 %v66
    %v106 = vunpack.c.l.b16 %v67
    %v107 = vunpack.c.l.b16 %v68
    %v108 = vunpack.c.l.b16 %v69
    %v109 = vpack.c.b16 %v94, %v93
    %v110 = vpack.c.b16 %v96, %v95
    %v111 = vpack.c.b16 %v98, %v97
    %v112 = vpack.c.b16 %v100, %v99
    %v113 = vpack.c.b16 %v102, %v101
    %v114 = vpack.c.b16 %v104, %v103
    %v115 = vpack.c.b16 %v106, %v105
    %v116 = vpack.c.b16 %v108, %v107
    %125 = vmatprep.subr.bf16.mxu0 0
    %126 = vmatpush1.bf16.msra.mxu0 %v109
    %127 = vmatprep.subr.bf16.mxu0 0
    %128 = vmatpush1.bf16.msra.mxu0 %v110
    %129 = vmatprep.subr.bf16.mxu0 0
    %130 = vmatpush1.bf16.msra.mxu0 %v111
    %131 = vmatprep.subr.bf16.mxu0 0
    %132 = vmatpush1.bf16.msra.mxu0 %v112
    %133 = vmatprep.subr.bf16.mxu0 0
    %134 = vmatpush1.bf16.msra.mxu0 %v113
    %135 = vmatprep.subr.bf16.mxu0 0
    %136 = vmatpush1.bf16.msra.mxu0 %v114
    %137 = vmatprep.subr.bf16.mxu0 0
    %138 = vmatpush1.bf16.msra.mxu0 %v115
    %139 = vmatprep.subr.bf16.mxu0 0
    %140 = vmatpush1.bf16.msra.mxu0 %v116
    %141 = vmatprep.subr.bf16.mxu0 0
    %142 = vmatpush1.bf16.msra.mxu0 0
    %143 = vmatprep.subr.bf16.mxu0 0
    %144 = vmatpush1.bf16.msra.mxu0 0
    %145 = vmatprep.subr.bf16.mxu0 0
    %146 = vmatpush1.bf16.msra.mxu0 0
    %147 = vmatprep.subr.bf16.mxu0 0
    %148 = vmatpush1.bf16.msra.mxu0 0
    %149 = vmatprep.subr.bf16.mxu0 0
    %150 = vmatpush1.bf16.msra.mxu0 0
    %151 = vmatprep.subr.bf16.mxu0 0
    %152 = vmatpush1.bf16.msra.mxu0 0
    %153 = vmatprep.subr.bf16.mxu0 0
    %154 = vmatpush1.bf16.msra.mxu0 0
    %155 = vmatprep.subr.bf16.mxu0 0
    %156 = vmatpush1.bf16.msra.mxu0 0
    %157 = vmatprep.mubr.bf16.mxu0 0
    %158 = vmatmul.mubr.bf16.gmra.mrb[0].mxu0 %v53
    %v159 = vpop.f32.mrb[0].mxu0
    %v160 = vadd.f32 %v75, %v159
    %v161 = vpop.f32.mrb[0].mxu0
    %v162 = vpop.f32.mrb[0].mxu0
    %v163 = vpop.f32.mrb[0].mxu0
    %164 = vdwg.mxu0
    %v165 = vtanh.pop %v160
    %v166 = vpack.c.bf16 %v165, %v165
    %v167 = vld [vmem:[#allocation5] sm:$0xff]
    %v168 = vld [vmem:[#allocation5 + $0x8] sm:$0xf]
    %v169 = vld [vmem:[#allocation5 + $0xc] sm:$0xff]
    %v170 = vld [vmem:[#allocation5 + $0x14] sm:$0xf]
    %v171 = vld [vmem:[#allocation5 + $0x18] sm:$0xff]
    %v172 = vld [vmem:[#allocation5 + $0x20] sm:$0xf]
    %v173 = vld [vmem:[#allocation5 + $0x24] sm:$0xff]
    %v174 = vld [vmem:[#allocation5 + $0x2c] sm:$0xf]
    %v175 = vld [vmem:[#allocation5 + $0x30] sm:$0xff]
    %v176 = vld [vmem:[#allocation5 + $0x38] sm:$0xf]
    %v177 = vld [vmem:[#allocation5 + $0x3c] sm:$0xff]
    %v178 = vld [vmem:[#allocation5 + $0x44] sm:$0xf]
    %v179 = vld [vmem:[#allocation5 + $0x48] sm:$0xff]
    %v180 = vld [vmem:[#allocation5 + $0x50] sm:$0xf]
    %v181 = vld [vmem:[#allocation5 + $0x54] sm:$0xff]
    %v182 = vld [vmem:[#allocation5 + $0x5c] sm:$0xf]
    %v183 = vld [vmem:[#allocation5 + $0x60] sm:$0xff]
    %v184 = vld [vmem:[#allocation5 + $0x68] sm:$0xf]
    %v185 = vld [vmem:[#allocation5 + $0x6c] sm:$0xff]
    %v186 = vld [vmem:[#allocation5 + $0x74] sm:$0xf]
    %v187 = vld [vmem:[#allocation5 + $0x78] sm:$0xff]
    %v188 = vld [vmem:[#allocation5 + $0x80] sm:$0xf]
    %v189 = vld [vmem:[#allocation5 + $0x84] sm:$0xff]
    %v190 = vld [vmem:[#allocation5 + $0x8c] sm:$0xf]
    %v191 = vld [vmem:[#allocation5 + $0x90] sm:$0xff]
    %v192 = vld [vmem:[#allocation5 + $0x98] sm:$0xf]
    %v193 = vld [vmem:[#allocation5 + $0x9c] sm:$0xff]
    %v194 = vld [vmem:[#allocation5 + $0xa4] sm:$0xf]
    %v195 = vld [vmem:[#allocation5 + $0xa8] sm:$0xff]
    %v196 = vld [vmem:[#allocation5 + $0xb0] sm:$0xf]
    %v197 = vld [vmem:[#allocation5 + $0xb4] sm:$0xff]
    %v198 = vld [vmem:[#allocation5 + $0xbc] sm:$0xf]
    %v199 = vld [vmem:[%s5] sm:$0x7]
    %v201 = vlaneseq
    %v202 = vshrl.u32 %v201, 7
    %v203 = vsub.s32 0, %v202
    %v204 = vrot.slane %v199, %v203
    %v205 = vlaneseq
    %v206 = vshrl.u32 %v205, 7
    %v207 = vsub.s32 1, %v206
    %v208 = vrot.slane %v199, %v207
    %v209 = vlaneseq
    %v210 = vshrl.u32 %v209, 7
    %v211 = vsub.s32 2, %v210
    %v212 = vrot.slane %v199, %v211
    %v248 = vunpack.c.l.b16 %v167
    %v249 = vunpack.c.h.b16 %v167
    %v250 = vunpack.c.l.b16 %v168
    %v251 = vunpack.c.l.b16 %v169
    %v252 = vunpack.c.h.b16 %v169
    %v253 = vunpack.c.l.b16 %v170
    %v254 = vunpack.c.l.b16 %v171
    %v255 = vunpack.c.h.b16 %v171
    %v256 = vunpack.c.l.b16 %v172
    %v257 = vunpack.c.l.b16 %v173
    %v258 = vunpack.c.h.b16 %v173
    %v259 = vunpack.c.l.b16 %v174
    %v260 = vunpack.c.l.b16 %v175
    %v261 = vunpack.c.h.b16 %v175
    %v262 = vunpack.c.l.b16 %v176
    %v263 = vunpack.c.l.b16 %v177
    %v264 = vunpack.c.h.b16 %v177
    %v265 = vunpack.c.l.b16 %v178
    %v266 = vunpack.c.l.b16 %v179
    %v267 = vunpack.c.h.b16 %v179
    %v268 = vunpack.c.l.b16 %v180
    %v269 = vunpack.c.l.b16 %v181
    %v270 = vunpack.c.h.b16 %v181
    %v271 = vunpack.c.l.b16 %v182
    %v272 = vunpack.c.l.b16 %v183
    %v273 = vunpack.c.h.b16 %v183
    %v274 = vunpack.c.l.b16 %v184
    %v275 = vunpack.c.l.b16 %v185
    %v276 = vunpack.c.h.b16 %v185
    %v277 = vunpack.c.l.b16 %v186
    %v278 = vunpack.c.l.b16 %v187
    %v279 = vunpack.c.h.b16 %v187
    %v280 = vunpack.c.l.b16 %v188
    %v281 = vunpack.c.l.b16 %v189
    %v282 = vunpack.c.h.b16 %v189
    %v283 = vunpack.c.l.b16 %v190
    %v284 = vunpack.c.l.b16 %v191
    %v285 = vunpack.c.h.b16 %v191
    %v286 = vunpack.c.l.b16 %v192
    %v287 = vunpack.c.l.b16 %v193
    %v288 = vunpack.c.h.b16 %v193
    %v289 = vunpack.c.l.b16 %v194
    %v290 = vunpack.c.l.b16 %v195
    %v291 = vunpack.c.h.b16 %v195
    %v292 = vunpack.c.l.b16 %v196
    %v293 = vunpack.c.l.b16 %v197
    %v294 = vunpack.c.h.b16 %v197
    %v295 = vunpack.c.l.b16 %v198
    %v296 = vpack.c.b16 %v251, %v248
    %v297 = vpack.c.b16 %v252, %v249
    %v298 = vpack.c.b16 %v253, %v250
    %v299 = vpack.c.b16 %v257, %v254
    %v300 = vpack.c.b16 %v258, %v255
    %v301 = vpack.c.b16 %v259, %v256
    %v302 = vpack.c.b16 %v263, %v260
    %v303 = vpack.c.b16 %v264, %v261
    %v304 = vpack.c.b16 %v265, %v262
    %v305 = vpack.c.b16 %v269, %v266
    %v306 = vpack.c.b16 %v270, %v267
    %v307 = vpack.c.b16 %v271, %v268
    %v308 = vpack.c.b16 %v275, %v272
    %v309 = vpack.c.b16 %v276, %v273
    %v310 = vpack.c.b16 %v277, %v274
    %v311 = vpack.c.b16 %v281, %v278
    %v312 = vpack.c.b16 %v282, %v279
    %v313 = vpack.c.b16 %v283, %v280
    %v314 = vpack.c.b16 %v287, %v284
    %v315 = vpack.c.b16 %v288, %v285
    %v316 = vpack.c.b16 %v289, %v286
    %v317 = vpack.c.b16 %v293, %v290
    %v318 = vpack.c.b16 %v294, %v291
    %v319 = vpack.c.b16 %v295, %v292
    %344 = vmatprep.subr.bf16.mxu0 %v297
    %345 = vmatpush1.bf16.msra.mxu0 %v296
    %346 = vmatprep.subr.bf16.mxu0 %v300
    %347 = vmatpush1.bf16.msra.mxu0 %v299
    %348 = vmatprep.subr.bf16.mxu0 %v303
    %349 = vmatpush1.bf16.msra.mxu0 %v302
    %350 = vmatprep.subr.bf16.mxu0 %v306
    %351 = vmatpush1.bf16.msra.mxu0 %v305
    %352 = vmatprep.subr.bf16.mxu0 %v309
    %353 = vmatpush1.bf16.msra.mxu0 %v308
    %354 = vmatprep.subr.bf16.mxu0 %v312
    %355 = vmatpush1.bf16.msra.mxu0 %v311
    %356 = vmatprep.subr.bf16.mxu0 %v315
    %357 = vmatpush1.bf16.msra.mxu0 %v314
    %358 = vmatprep.subr.bf16.mxu0 %v318
    %359 = vmatpush1.bf16.msra.mxu0 %v317
    %360 = vmatprep.subr.bf16.mxu0 0
    %361 = vmatpush1.bf16.msra.mxu0 0
    %362 = vmatprep.subr.bf16.mxu0 0
    %363 = vmatpush1.bf16.msra.mxu0 0
    %364 = vmatprep.subr.bf16.mxu0 0
    %365 = vmatpush1.bf16.msra.mxu0 0
    %366 = vmatprep.subr.bf16.mxu0 0
    %367 = vmatpush1.bf16.msra.mxu0 0
    %368 = vmatprep.subr.bf16.mxu0 0
    %369 = vmatpush1.bf16.msra.mxu0 0
    %370 = vmatprep.subr.bf16.mxu0 0
    %371 = vmatpush1.bf16.msra.mxu0 0
    %372 = vmatprep.subr.bf16.mxu0 0
    %373 = vmatpush1.bf16.msra.mxu0 0
    %374 = vmatprep.subr.bf16.mxu0 0
    %375 = vmatpush1.bf16.msra.mxu0 0
    %376 = vmatprep.mubr.bf16.mxu0 0
    %377 = vmatmul.mubr.bf16.gmra.mrb[0].mxu0 %v166
    %v378 = vpop.f32.mrb[0].mxu0
    %v379 = vadd.f32 %v204, %v378
    %v380 = vpop.f32.mrb[0].mxu0
    %v381 = vadd.f32 %v208, %v380
    %v382 = vpop.f32.mrb[0].mxu0
    %v383 = vpop.f32.mrb[0].mxu0
    %384 = vdwg.mxu0
    %385 = vmatprep.subr.bf16.mxu0 0
    %386 = vmatpush1.bf16.msra.mxu0 %v298
    %387 = vmatprep.subr.bf16.mxu0 0
    %388 = vmatpush1.bf16.msra.mxu0 %v301
    %389 = vmatprep.subr.bf16.mxu0 0
    %390 = vmatpush1.bf16.msra.mxu0 %v304
    %391 = vmatprep.subr.bf16.mxu0 0
    %392 = vmatpush1.bf16.msra.mxu0 %v307
    %393 = vmatprep.subr.bf16.mxu0 0
    %394 = vmatpush1.bf16.msra.mxu0 %v310
    %395 = vmatprep.subr.bf16.mxu0 0
    %396 = vmatpush1.bf16.msra.mxu0 %v313
    %397 = vmatprep.subr.bf16.mxu0 0
    %398 = vmatpush1.bf16.msra.mxu0 %v316
    %399 = vmatprep.subr.bf16.mxu0 0
    %400 = vmatpush1.bf16.msra.mxu0 %v319
    %401 = vmatprep.subr.bf16.mxu0 0
    %402 = vmatpush1.bf16.msra.mxu0 0
    %403 = vmatprep.subr.bf16.mxu0 0
    %404 = vmatpush1.bf16.msra.mxu0 0
    %405 = vmatprep.subr.bf16.mxu0 0
    %406 = vmatpush1.bf16.msra.mxu0 0
    %407 = vmatprep.subr.bf16.mxu0 0
    %408 = vmatpush1.bf16.msra.mxu0 0
    %409 = vmatprep.subr.bf16.mxu0 0
    %410 = vmatpush1.bf16.msra.mxu0 0
    %411 = vmatprep.subr.bf16.mxu0 0
    %412 = vmatpush1.bf16.msra.mxu0 0
    %413 = vmatprep.subr.bf16.mxu0 0
    %414 = vmatpush1.bf16.msra.mxu0 0
    %415 = vmatprep.subr.bf16.mxu0 0
    %416 = vmatpush1.bf16.msra.mxu0 0
    %417 = vmatprep.mubr.bf16.mxu0 0
    %418 = vmatmul.mubr.bf16.gmra.mrb[0].mxu0 %v166
    %v419 = vpop.f32.mrb[0].mxu0
    %v420 = vadd.f32 %v212, %v419
    %v421 = vpop.f32.mrb[0].mxu0
    %v422 = vpop.f32.mrb[0].mxu0
    %v423 = vpop.f32.mrb[0].mxu0
    %424 = vdwg.mxu0
    %v425 = vxor.u32 %v379, 2147483648
    %v426 = vmul.f32 %v425, 1.442695
    %v427 = vpow.pop %v426
    %v428 = vadd.f32 %v427, 1.0
    %v429 = vrcp.pop %v428
    %v430 = vmul.f32 1.0, %v429
    %v431 = vsub.f32 0.0, %v430
    %v432 = vld [vmem:[%s1] sm:$0xff]
    %434 = vset.pattern.permute.xlu0 0
    %435 = vperm.xlu0 %434, %v432
    %v436 = vpop.permute.xlu0 %435
    %v438 = vmul.f32 %v431, %v436
    %v439 = vxor.u32 %v438, 2147483648
    %v440 = vmul.f32 %v439, 1.442695
    %v441 = vpow.pop %v440
    %v442 = vadd.f32 %v441, 1.0
    %v443 = vrcp.pop %v442
    %v444 = vmul.f32 1.0, %v443
    %v445 = vsub.f32 %v381, %v420
    %v446 = vmul.f32 %v444, %v445
    %v447 = vadd.f32 %v420, %v446
    %448 = vst [vmem:[#allocation7] sm:$0xff] %v447
    // Predicated region
    $region34: #{tpu_custom_call.1} parent=1 // pred_check
      _
    $region35: #{tpu_custom_call.1} parent=1 // pred_check_branch
      %450 = sbr.rel (0) target = $region37
    $region36: #{tpu_custom_call.1} parent=1 // pred_region
      %s452 = ssub.s32 128, 128
      %453 = vsyncadd [#allocation4], %s452
      %s455 = sshll.u32 [#allocation7], 4
      %s456 = int_to_ptr.vmem [resolvable:$true] %s455
      %458 = dma.vmem_to_hbm [thread:$0]  %s456, 128, %s6, [#allocation4]
    $region37: #{tpu_custom_call.1} parent=1 // pred_fallthru
      _
    // Predicated region
    $region38: #{tpu_custom_call.1} parent=1 // pred_check
      _
    $region39: #{tpu_custom_call.1} parent=1 // pred_check_branch
      %460 = sbr.rel (0) target = $region41
    $region40: #{tpu_custom_call.1} parent=1 // pred_region
      %461 = dma.done [#allocation4], 128
    $region41: #{tpu_custom_call.1} parent=1 // pred_fallthru
      _
    %462 = vsyncpa [#allocation3], 1
    %463 = vsyncpa [#allocation6], 1
    %464 = vsyncpa [#allocation4], 1

</llo_original>
